<compile_context>
chip_gen: v5e
topology: v5e:2x2
jax: 0.10.0
libtpu: 0.0.40
codegen_flags: <defaults>
</compile_context>

<pallas_src>
import functools

import jax
import jax.numpy as jnp
from jax.experimental import pallas as pl
from jax.experimental.pallas import tpu as pltpu

LANE = 128  # lane width (last dim tile quantum)
SUB = 8     # sublane width (second-to-last dim tile quantum)


def mlp_kernel(x_ref, w1_ref, b1_ref, w2_ref, b2_ref, o_ref):
    # fc1: x @ W1 + b1, ReLU  (MXU matmul, f32 accumulation; VPU bias+ReLU).
    h = jnp.dot(x_ref[...], w1_ref[...], preferred_element_type=jnp.float32)
    h = jnp.maximum(h + b1_ref[...], 0.0)          # b1 is [1, H], broadcasts
    # fc2: h @ W2 + b2  (lane-dense 128-wide output tile -> unmasked stores).
    y = jnp.dot(h, w2_ref[...], preferred_element_type=jnp.float32)
    o_ref[...] = (y + b2_ref[...]).astype(o_ref.dtype)


def _round_up(n, m):
    return ((n + m - 1) // m) * m


def _choose_batch_tile(b_rounded):
    """Largest batch tile (multiple of 8) that divides b_rounded exactly.

    Capped at 1024 rows; for big batches the cap is lowered so the grid has
    >= 2 independent steps (lets v7x megacore shard the "parallel" axis).
    Exact division means zero padded (zero-work) rows at awkward batch sizes.
    """
    cap = 1024
    if b_rounded > 256:
        cap = min(cap, _round_up(-(-b_rounded // 2), SUB))  # aim for >=2 tiles
    tb = min(b_rounded, cap)
    while b_rounded % tb:
        tb -= SUB
    return tb


def pad_linear_params(w1, b1, w2, b2):
    """One-time (init-time) param prep.

    w1: [D_in, H], b1: [H], w2: [H, D_out], b2: [D_out]
    (weights pre-transposed vs PyTorch nn.Linear's [out, in]).

    Only the output dim is zero-padded to a lane multiple (for unmasked,
    lane-dense stores). D_in and H are left as-is; Mosaic pads them in-vreg.
    Rebuild these whenever the real weights update.
    """
    D_in, H = w1.shape
    D_out = w2.shape[1]
    D_out_p = _round_up(D_out, LANE)

    b1p = b1.reshape(1, H)
    w2p = jnp.zeros((H, D_out_p), w2.dtype).at[:, :D_out].set(w2)
    b2p = jnp.zeros((1, D_out_p), b2.dtype).at[0, :D_out].set(b2)
    return w1, b1p, w2p, b2p, D_out


@functools.partial(jax.jit, static_argnames=("d_out",))
def simple_nn_forward(x, w1, b1p, w2p, b2p, *, d_out):
    """x: [B, D_in]; params from pad_linear_params. Returns [B, d_out]."""
    B, D_in = x.shape
    H = w1.shape[1]
    D_out_p = w2p.shape[1]

    # Only the batch needs sublane rounding; feature dims stay un-padded.
    B_r = _round_up(B, SUB)
    TB = _choose_batch_tile(B_r)
    n_tiles = B_r // TB
    xr = x if B_r == B else jnp.zeros((B_r, D_in), x.dtype).at[:B].set(x)

    # Advisory cost hint for XLA's scheduler around the custom call.
    flops = 2 * B_r * (D_in * H + H * D_out_p)
    bytes_accessed = 4 * (B_r * D_in + D_in * H + H
                          + H * D_out_p + D_out_p + B_r * D_out_p)

    out_p = pl.pallas_call(
        mlp_kernel,
        out_shape=jax.ShapeDtypeStruct((B_r, D_out_p), x.dtype),
        grid_spec=pl.GridSpec(
            grid=(n_tiles,),
            in_specs=[
                # x: tiled over batch; last dim == full array dim (legal).
                pl.BlockSpec((TB, D_in), lambda i: (i, 0)),
                pl.BlockSpec((D_in, H), lambda i: (0, 0)),      # w1 resident
                pl.BlockSpec((1, H), lambda i: (0, 0)),         # b1 resident
                pl.BlockSpec((H, D_out_p), lambda i: (0, 0)),   # w2 resident
                pl.BlockSpec((1, D_out_p), lambda i: (0, 0)),   # b2 resident
            ],
            out_specs=pl.BlockSpec((TB, D_out_p), lambda i: (i, 0)),
        ),
        compiler_params=pltpu.CompilerParams(
            dimension_semantics=("parallel",),   # batch tiles are independent
        ),
        cost_estimate=pl.CostEstimate(
            flops=flops, transcendentals=0, bytes_accessed=bytes_accessed),
    )(xr, w1, b1p, w2p, b2p)

    # Slice away batch rounding and the lane padding of the output dim
    # (fused into the jitted computation).
    return out_p[:B, :d_out]


if __name__ == "__main__":
    # Shapes implied by the module: input_dim = data_x.size(1) (pick 4),
    # hidden_dim = 64, output_dim = nn = 2. Small batch of 8.
    B, D_in, H, D_out = 8, 4, 64, 2

    key = jax.random.PRNGKey(0)
    k_x, k_w1, k_b1, k_w2, k_b2 = jax.random.split(key, 5)

    x = jax.random.normal(k_x, (B, D_in), dtype=jnp.float32)
    # PyTorch nn.Linear stores W as [out, in]; here weights are kept
    # pre-transposed to [in, out] so the kernel computes plain x @ W.
    w1 = jax.random.normal(k_w1, (D_in, H), dtype=jnp.float32) * 0.1
    b1 = jax.random.normal(k_b1, (H,), dtype=jnp.float32) * 0.1
    w2 = jax.random.normal(k_w2, (H, D_out), dtype=jnp.float32) * 0.1
    b2 = jax.random.normal(k_b2, (D_out,), dtype=jnp.float32) * 0.1

    # One-time param prep (would live at model init in real code).
    w1k, b1p, w2p, b2p, d_out = pad_linear_params(w1, b1, w2, b2)

    out = simple_nn_forward(x, w1k, b1p, w2p, b2p, d_out=d_out)
    jax.block_until_ready(out)

    # Reference check in plain JAX (same semantics as the PyTorch forward).
    ref = jnp.maximum(x @ w1 + b1, 0.0) @ w2 + b2
    assert out.shape == (B, D_out)
    assert jnp.allclose(out, ref, atol=1e-5, rtol=1e-5)

    print("KERNEL_OK")
</pallas_src>

<mosaic_0001>
module attributes {stable_mosaic.version = 11 : i64} {
  func.func @mlp_kernel(%arg0: i32, %arg1: memref<8x4xf32, #tpu.memory_space<vmem>>, %arg2: memref<4x64xf32, #tpu.memory_space<vmem>>, %arg3: memref<1x64xf32, #tpu.memory_space<vmem>>, %arg4: memref<64x128xf32, #tpu.memory_space<vmem>>, %arg5: memref<1x128xf32, #tpu.memory_space<vmem>>, %arg6: memref<8x128xf32, #tpu.memory_space<vmem>>) attributes {dimension_semantics = [#tpu.dimension_semantics<parallel>], iteration_bounds = array<i64: 1>, scalar_prefetch = 0 : i64, scratch_operands = 0 : i64, tpu.core_type = #tpu.core_type<tc>, window_params = [{transform_indices = @transform_0, window_bounds = array<i64: 8, 4>}, {pipeline_mode = #tpu.pipeline_mode<synchronous>, transform_indices = @transform_1, window_bounds = array<i64: 4, 64>}, {pipeline_mode = #tpu.pipeline_mode<synchronous>, transform_indices = @transform_2, window_bounds = array<i64: 1, 64>}, {pipeline_mode = #tpu.pipeline_mode<synchronous>, transform_indices = @transform_3, window_bounds = array<i64: 64, 128>}, {pipeline_mode = #tpu.pipeline_mode<synchronous>, transform_indices = @transform_4, window_bounds = array<i64: 1, 128>}, {transform_indices = @transform_5, window_bounds = array<i64: 8, 128>}]} {
    %c0 = arith.constant 0 : index
    %c0_0 = arith.constant 0 : index
    %0 = vector.load %arg1[%c0, %c0_0] : memref<8x4xf32, #tpu.memory_space<vmem>>, vector<8x4xf32>
    %c0_1 = arith.constant 0 : index
    %c0_2 = arith.constant 0 : index
    %1 = vector.load %arg2[%c0_1, %c0_2] : memref<4x64xf32, #tpu.memory_space<vmem>>, vector<4x64xf32>
    %cst = arith.constant dense<0.000000e+00> : vector<8x64xf32>
    %2 = tpu.matmul %0, %1, %cst {dimension_numbers = #tpu.dot_dimension_numbers<[1], [0], [0], [1], [0, 0, 1, 1], [], []>} : vector<8x4xf32>, vector<4x64xf32>, vector<8x64xf32> -> vector<8x64xf32>
    %c0_3 = arith.constant 0 : index
    %c0_4 = arith.constant 0 : index
    %3 = vector.load %arg3[%c0_3, %c0_4] : memref<1x64xf32, #tpu.memory_space<vmem>>, vector<1x64xf32>
    %4 = vector.broadcast %3 : vector<1x64xf32> to vector<8x64xf32>
    %5 = arith.addf %2, %4 : vector<8x64xf32>
    %cst_5 = arith.constant 0.000000e+00 : f32
    %6 = vector.broadcast %cst_5 : f32 to vector<8x64xf32>
    %7 = arith.maximumf %5, %6 : vector<8x64xf32>
    %c0_6 = arith.constant 0 : index
    %c0_7 = arith.constant 0 : index
    %8 = vector.load %arg4[%c0_6, %c0_7] : memref<64x128xf32, #tpu.memory_space<vmem>>, vector<64x128xf32>
    %cst_8 = arith.constant dense<0.000000e+00> : vector<8x128xf32>
    %9 = tpu.matmul %7, %8, %cst_8 {dimension_numbers = #tpu.dot_dimension_numbers<[1], [0], [0], [1], [0, 0, 1, 1], [], []>} : vector<8x64xf32>, vector<64x128xf32>, vector<8x128xf32> -> vector<8x128xf32>
    %c0_9 = arith.constant 0 : index
    %c0_10 = arith.constant 0 : index
    %10 = vector.load %arg5[%c0_9, %c0_10] : memref<1x128xf32, #tpu.memory_space<vmem>>, vector<1x128xf32>
    %11 = vector.broadcast %10 : vector<1x128xf32> to vector<8x128xf32>
    %12 = arith.addf %9, %11 : vector<8x128xf32>
    %c0_11 = arith.constant 0 : index
    %c0_12 = arith.constant 0 : index
    %13 = vector.load %arg6[%c0_11, %c0_12] : memref<8x128xf32, #tpu.memory_space<vmem>>, vector<8x128xf32>
    tpu.vector_store %arg6[%c0_11, %c0_12], %12 {strides = array<i32>} : memref<8x128xf32, #tpu.memory_space<vmem>>, vector<8x128xf32>,
    return
  }
  func.func @transform_0(%arg0: i32) -> (i32, i32) {
    %c0_i32 = arith.constant 0 : i32
    %c0_i32_0 = arith.constant 0 : i32
    return %arg0, %c0_i32 : i32, i32
  }
  func.func @transform_1(%arg0: i32) -> (i32, i32) {
    %c0_i32 = arith.constant 0 : i32
    %c0_i32_0 = arith.constant 0 : i32
    %c0_i32_1 = arith.constant 0 : i32
    return %c0_i32, %c0_i32_0 : i32, i32
  }
  func.func @transform_2(%arg0: i32) -> (i32, i32) {
    %c0_i32 = arith.constant 0 : i32
    %c0_i32_0 = arith.constant 0 : i32
    %c0_i32_1 = arith.constant 0 : i32
    return %c0_i32, %c0_i32_0 : i32, i32
  }
  func.func @transform_3(%arg0: i32) -> (i32, i32) {
    %c0_i32 = arith.constant 0 : i32
    %c0_i32_0 = arith.constant 0 : i32
    %c0_i32_1 = arith.constant 0 : i32
    return %c0_i32, %c0_i32_0 : i32, i32
  }
  func.func @transform_4(%arg0: i32) -> (i32, i32) {
    %c0_i32 = arith.constant 0 : i32
    %c0_i32_0 = arith.constant 0 : i32
    %c0_i32_1 = arith.constant 0 : i32
    return %c0_i32, %c0_i32_0 : i32, i32
  }
  func.func @transform_5(%arg0: i32) -> (i32, i32) {
    %c0_i32 = arith.constant 0 : i32
    %c0_i32_0 = arith.constant 0 : i32
    return %arg0, %c0_i32 : i32, i32
  }
}

</mosaic_0001>

<llo_original>
// kernel: simple_nn_forward.1
$region0: #{simple_nn_forward.1}
  #allocation0 [shape = 'u32[]', space=smem, size = 0x4, offset = 0x4, fixed_abs, tag = 'smem constant byte address 0x4 - core index']
  #allocation1 [shape = 'u32[72,128]{1,0:T(1,128)}', space=vmem, size = 0x9000, scoped, tag = 'internal scratch']
  %s0 = inlined_call_operand.vmem [shape: f32[8,4], index: 0, kind: input, shape index: {}]
  %s1 = inlined_call_operand.vmem [shape: f32[4,64], index: 1, kind: input, shape index: {}]
  %s2 = inlined_call_operand.vmem [shape: f32[1,64], index: 2, kind: input, shape index: {}]
  %s3 = inlined_call_operand.hbm [shape: f32[64,128], index: 3, kind: input, shape index: {}]
  %s4 = inlined_call_operand.vmem [shape: f32[1,128], index: 4, kind: input, shape index: {}]
  %s5 = inlined_call_operand.vmem [shape: f32[8,128], index: 5, kind: output, shape index: {}]
  %s6 = sld [smem:[#allocation0]]
  $region34: #{simple_nn_forward.1} parent=0
    _
  %s8 = ssub.s32 1, %s6
  %s9 = scalar_select 0, %s8, %s6
  $region1: #{simple_nn_forward.1} parent=0
    #allocation2 [shape = 'u8[32768]{0}', space=vmem, size = 0x8000, scoped, tag = 'input window, operand 3, single buffered']
    #allocation3 [shape = 's32[1]{0}', space=sflag, size = 0x4, scoped, tag = 'scoped memory for simple_nn_forward.1']
    %10 = vsyncpa [#allocation3], 0
    // Predicated region
    $region2: #{simple_nn_forward.1} parent=1 // pred_check
      _
    $region3: #{simple_nn_forward.1} parent=1 // pred_check_branch
      %12 = sbr.rel (0) target = $region5
    $region4: #{simple_nn_forward.1} parent=1 // pred_region
      _
    $region5: #{simple_nn_forward.1} parent=1 // pred_fallthru
      _
    // Predicated region
    $region6: #{simple_nn_forward.1} parent=1 // pred_check
      _
    $region7: #{simple_nn_forward.1} parent=1 // pred_check_branch
      %14 = sbr.rel (0) target = $region9
    $region8: #{simple_nn_forward.1} parent=1 // pred_region
      _
    $region9: #{simple_nn_forward.1} parent=1 // pred_fallthru
      _
    // Predicated region
    $region10: #{simple_nn_forward.1} parent=1 // pred_check
      _
    $region11: #{simple_nn_forward.1} parent=1 // pred_check_branch
      %16 = sbr.rel (0) target = $region13
    $region12: #{simple_nn_forward.1} parent=1 // pred_region
      _
    $region13: #{simple_nn_forward.1} parent=1 // pred_fallthru
      _
    // Predicated region
    $region14: #{simple_nn_forward.1} parent=1 // pred_check
      _
    $region15: #{simple_nn_forward.1} parent=1 // pred_check_branch
      %18 = sbr.rel (0) target = $region17
    $region16: #{simple_nn_forward.1} parent=1 // pred_region
      %20 = vsyncadd [#allocation3], 0
      %s21 = sshll.u32 %s3, 4
      %s22 = int_to_ptr.hbm [resolvable:$true] %s21
      %s23 = sshll.u32 [#allocation2], 4
      %s24 = int_to_ptr.vmem [resolvable:$true] %s23
      %29 = dma.hbm_to_vmem [thread:$0]  %s22, 1024, %s24, [#allocation3], 128, 128, 8
    $region17: #{simple_nn_forward.1} parent=1 // pred_fallthru
      _
    // Predicated region
    $region18: #{simple_nn_forward.1} parent=1 // pred_check
      _
    $region19: #{simple_nn_forward.1} parent=1 // pred_check_branch
      %31 = sbr.rel (0) target = $region21
    $region20: #{simple_nn_forward.1} parent=1 // pred_region
      _
    $region21: #{simple_nn_forward.1} parent=1 // pred_fallthru
      _
    // Predicated region
    $region22: #{simple_nn_forward.1} parent=1 // pred_check
      _
    $region23: #{simple_nn_forward.1} parent=1 // pred_check_branch
      %33 = sbr.rel (0) target = $region25
    $region24: #{simple_nn_forward.1} parent=1 // pred_region
      %35 = dma.done [#allocation3], 1024
    $region25: #{simple_nn_forward.1} parent=1 // pred_fallthru
      _
    %v36 = vld [vmem:[%s0] sm:$0xff]
    %v37 = vld [vmem:[%s1] sm:$0xf]
    %v38 = vld [vmem:[%s2] sm:$0x1]
    %v40 = vperm.slane %v38, 0
    %vm42 = vcmask 31744
    %v44 = vsel %vm42, %v36, 0
    %vm46 = vcmask 1043456
    %v48 = vsel %vm46, %v37, 0
    %50 = vmatpush.msra.mxu0 0.0
    %51 = vmatpush.msra.mxu0 0.0
    %52 = vmatpush.msra.mxu0 0.0
    %53 = vmatpush.msra.mxu0 0.0
    %54 = vmatpush.msra.mxu0 0.0
    %55 = vmatpush.msra.mxu0 0.0
    %56 = vmatpush.msra.mxu0 0.0
    %57 = vmatpush.msra.mxu0 0.0
    %58 = vmatpush.msra.mxu0 0.0
    %59 = vmatpush.msra.mxu0 0.0
    %60 = vmatpush.msra.mxu0 0.0
    %61 = vmatpush.msra.mxu0 0.0
    %62 = vmatpush.msra.mxu0 0.0
    %63 = vmatpush.msra.mxu0 0.0
    %64 = vmatpush.msra.mxu0 0.0
    %65 = vmatpush.msra.mxu0 %v48
    %66 = vmatmul.f32.gmra.mxu0 %v44
    %v67 = vpop.f32.mrf.mxu0
    %v68 = vadd.f32 %v40, %v67
    %69 = vdwg.mxu0
    %v70 = vmax.f32 %v68, 0.0
    %v71 = vld [vmem:[#allocation2] sm:$0xff]
    %v72 = vld [vmem:[#allocation2 + $0x8] sm:$0xff]
    %v73 = vld [vmem:[#allocation2 + $0x10] sm:$0xff]
    %v74 = vld [vmem:[#allocation2 + $0x18] sm:$0xff]
    %v75 = vld [vmem:[#allocation2 + $0x20] sm:$0xff]
    %v76 = vld [vmem:[#allocation2 + $0x28] sm:$0xff]
    %v77 = vld [vmem:[#allocation2 + $0x30] sm:$0xff]
    %v78 = vld [vmem:[#allocation2 + $0x38] sm:$0xff]
    %v79 = vld [vmem:[%s4] sm:$0x1]
    %v81 = vperm.slane %v79, 0
    %vm83 = vcmask 523264
    %v85 = vsel %vm83, %v70, 0
    %87 = vmatpush.msra.mxu0 0.0
    %88 = vmatpush.msra.mxu0 0.0
    %89 = vmatpush.msra.mxu0 0.0
    %90 = vmatpush.msra.mxu0 0.0
    %91 = vmatpush.msra.mxu0 0.0
    %92 = vmatpush.msra.mxu0 0.0
    %93 = vmatpush.msra.mxu0 0.0
    %94 = vmatpush.msra.mxu0 0.0
    %95 = vmatpush.msra.mxu0 %v78
    %96 = vmatpush.msra.mxu0 %v77
    %97 = vmatpush.msra.mxu0 %v76
    %98 = vmatpush.msra.mxu0 %v75
    %99 = vmatpush.msra.mxu0 %v74
    %100 = vmatpush.msra.mxu0 %v73
    %101 = vmatpush.msra.mxu0 %v72
    %102 = vmatpush.msra.mxu0 %v71
    %103 = vmatmul.f32.gmra.mxu0 %v85
    %v104 = vpop.f32.mrf.mxu0
    %v105 = vadd.f32 %v81, %v104
    %106 = vdwg.mxu0
    %107 = vst [vmem:[%s5] sm:$0xff] %v105
    // Predicated region
    $region26: #{simple_nn_forward.1} parent=1 // pred_check
      _
    $region27: #{simple_nn_forward.1} parent=1 // pred_check_branch
      %109 = sbr.rel (0) target = $region29
    $region28: #{simple_nn_forward.1} parent=1 // pred_region
      _
    $region29: #{simple_nn_forward.1} parent=1 // pred_fallthru
      _
    // Predicated region
    $region30: #{simple_nn_forward.1} parent=1 // pred_check
      _
    $region31: #{simple_nn_forward.1} parent=1 // pred_check_branch
      %111 = sbr.rel (0) target = $region33
    $region32: #{simple_nn_forward.1} parent=1 // pred_region
      _
    $region33: #{simple_nn_forward.1} parent=1 // pred_fallthru
      _
    %112 = vsyncpa [#allocation3], 1

</llo_original>
